<compile_context>
chip_gen: v7x
topology: tpu7x:2x2x1
jax: 0.10.0
libtpu: 0.0.40
codegen_flags: <defaults>
</compile_context>

<pallas_src>
import functools

import jax
import jax.numpy as jnp
from jax import lax
from jax.experimental import pallas as pl
from jax.experimental.pallas import tpu as pltpu


def _round_up(x, m):
    return (x + m - 1) // m * m


def proto_cls_kernel(x_ref, wt_ref, o_ref, *, eps):
    # x_ref:  (TM, D)  f32   row tile of the input
    # wt_ref: (D, TN)  bf16  weight tile (row-normalized prototypes, 1/temp folded in)
    # o_ref:  (TM, TN) f32   logits tile
    x = x_ref[...].astype(jnp.float32)

    # F.normalize(x, p=2, dim=1, eps=1e-12): x / clamp_min(||x||_2, eps)
    #   == x * rsqrt(clamp_min(sum(x*x), eps*eps))   (sqrt is monotone)
    # rsqrt lowers to the EUP (separate VLIW slot), so it hides under the MXU.
    sumsq = jnp.sum(x * x, axis=-1, keepdims=True)
    x_n = x * lax.rsqrt(jnp.maximum(sumsq, eps * eps))

    # bf16 x bf16 -> f32 accumulation on the MXU (fast path).
    o_ref[...] = jnp.dot(x_n.astype(jnp.bfloat16), wt_ref[...],
                         preferred_element_type=jnp.float32)


def proto_cls_prepare_weight(w, temp=0.05):
    """One-time host-side prep (cache the result outside the hot loop):
    row-normalize the prototypes (ProtoCLS.weight_norm), fold in 1/temp,
    transpose to (in_dim, out_dim) and cast to bf16 for the MXU."""
    w = w.astype(jnp.float32)
    w_scaled = w / (jnp.linalg.norm(w, axis=1, keepdims=True) * temp)
    return w_scaled.T.astype(jnp.bfloat16)  # (D, C)


def proto_cls_forward(x, wt, eps=1e-12, tile_m=256, tile_n=512):
    """x: (N, in_dim) f32; wt: prepared (in_dim, out_dim) bf16 weight from
    proto_cls_prepare_weight. Returns (N, out_dim) f32 logits."""
    N, D = x.shape
    D2, C = wt.shape
    assert D == D2, "weight / input feature dims disagree"

    # Lane-dense tiling: rows in multiples of 8, output columns in multiples
    # of 128 (unmasked vst). D stays whole in every block because the row
    # L2-norm needs the full feature vector.
    # TODO(synk): if D ever becomes too large for (TM, D) + (D, TN) residency,
    # split K for the matmul only (f32 VMEM accumulator + pl.when init/finalize).
    TM = min(tile_m, _round_up(N, 8))
    TN = min(tile_n, _round_up(C, 128))
    N_pad = _round_up(N, TM)
    C_pad = _round_up(C, TN)

    x_p = x if N_pad == N else jnp.pad(x, ((0, N_pad - N), (0, 0)))
    wt_p = wt if C_pad == C else jnp.pad(wt, ((0, 0), (0, C_pad - C)))

    grid = (N_pad // TM, C_pad // TN)
    kernel = functools.partial(proto_cls_kernel, eps=eps)

    # Rough VMEM budget: double-buffered x / out tiles + resident weight tile.
    vmem_bytes = 2 * TM * D * 4 + 2 * TM * TN * 4 + 2 * D * TN * 2
    vmem_limit = int(min(max(4 * vmem_bytes, 8 << 20), 48 << 20))

    cost = pl.CostEstimate(
        flops=2 * N_pad * D * C_pad,
        transcendentals=N_pad,
        bytes_accessed=x_p.size * 4 + wt_p.size * 2 + N_pad * C_pad * 4,
    )

    out = pl.pallas_call(
        kernel,
        out_shape=jax.ShapeDtypeStruct((N_pad, C_pad), jnp.float32),
        grid=grid,
        in_specs=[
            pl.BlockSpec((TM, D), lambda i, j: (i, 0)),
            pl.BlockSpec((D, TN), lambda i, j: (0, j)),  # resident across row tiles
        ],
        out_specs=pl.BlockSpec((TM, TN), lambda i, j: (i, j)),
        compiler_params=pltpu.CompilerParams(
            dimension_semantics=("parallel", "parallel"),
            vmem_limit_bytes=vmem_limit,
        ),
        cost_estimate=cost,
    )(x_p, wt_p)

    return out[:N, :C]


def proto_cls_reference(x, w, temp=0.05, eps=1e-12):
    """Pure-JAX f32 reference mirroring the PyTorch module."""
    w_norm = w / jnp.linalg.norm(w, axis=1, keepdims=True)
    xn = x / jnp.maximum(jnp.linalg.norm(x, axis=1, keepdims=True), eps)
    return (xn @ w_norm.T) / temp


if __name__ == "__main__":
    key = jax.random.PRNGKey(0)
    kx, kw = jax.random.split(key)

    N, in_dim, out_dim = 8, 32, 16
    temp = 0.05

    x = jax.random.normal(kx, (N, in_dim), dtype=jnp.float32)
    # Deterministic fc weight (out_dim, in_dim); weight_norm makes scale irrelevant.
    w = jax.random.normal(kw, (out_dim, in_dim), dtype=jnp.float32) * 0.02

    # Weight prep happens once (cache this outside the hot loop in real use).
    wt = proto_cls_prepare_weight(w, temp=temp)

    out = jax.block_until_ready(proto_cls_forward(x, wt))

    ref = proto_cls_reference(x, w, temp=temp)
    assert out.shape == (N, out_dim)
    # bf16 MXU operands loosen tolerance to ~1e-2 relative (logits ~ cos/temp).
    assert jnp.allclose(out, ref, atol=0.1, rtol=1e-2), "mismatch vs reference"

    print("KERNEL_OK")
</pallas_src>

<mosaic_0001>
module attributes {stable_mosaic.version = 11 : i64} {
  func.func @proto_cls_kernel(%arg0: i32, %arg1: i32, %arg2: memref<8x32xf32, #tpu.memory_space<vmem>>, %arg3: memref<32x128xbf16, #tpu.memory_space<vmem>>, %arg4: memref<8x128xf32, #tpu.memory_space<vmem>>) attributes {dimension_semantics = [#tpu.dimension_semantics<parallel>, #tpu.dimension_semantics<parallel>], iteration_bounds = array<i64: 1, 1>, scalar_prefetch = 0 : i64, scratch_operands = 0 : i64, tpu.core_type = #tpu.core_type<tc>, window_params = [{transform_indices = @transform_0, window_bounds = array<i64: 8, 32>}, {transform_indices = @transform_1, window_bounds = array<i64: 32, 128>}, {transform_indices = @transform_2, window_bounds = array<i64: 8, 128>}]} {
    %c0 = arith.constant 0 : index
    %c0_0 = arith.constant 0 : index
    %0 = vector.load %arg2[%c0, %c0_0] : memref<8x32xf32, #tpu.memory_space<vmem>>, vector<8x32xf32>
    %1 = arith.mulf %0, %0 : vector<8x32xf32>
    %cst = arith.constant dense<0.000000e+00> : vector<8xf32>
    %2 = vector.multi_reduction <add>, %1, %cst [1] : vector<8x32xf32> to vector<8xf32>
    %3 = vector.shape_cast %2 : vector<8xf32> to vector<8x1xf32>
    %cst_1 = arith.constant 1.000000e-24 : f32
    %4 = vector.broadcast %cst_1 : f32 to vector<8x1xf32>
    %5 = arith.maximumf %3, %4 : vector<8x1xf32>
    %6 = math.rsqrt %5 : vector<8x1xf32>
    %7 = vector.broadcast %6 : vector<8x1xf32> to vector<8x32xf32>
    %8 = arith.mulf %0, %7 : vector<8x32xf32>
    %9 = arith.truncf %8 : vector<8x32xf32> to vector<8x32xbf16>
    %c0_2 = arith.constant 0 : index
    %c0_3 = arith.constant 0 : index
    %10 = vector.load %arg3[%c0_2, %c0_3] : memref<32x128xbf16, #tpu.memory_space<vmem>>, vector<32x128xbf16>
    %cst_4 = arith.constant dense<0.000000e+00> : vector<8x128xf32>
    %11 = tpu.matmul %9, %10, %cst_4 {dimension_numbers = #tpu.dot_dimension_numbers<[1], [0], [0], [1], [0, 0, 1, 1], [], []>} : vector<8x32xbf16>, vector<32x128xbf16>, vector<8x128xf32> -> vector<8x128xf32>
    %c0_5 = arith.constant 0 : index
    %c0_6 = arith.constant 0 : index
    %12 = vector.load %arg4[%c0_5, %c0_6] : memref<8x128xf32, #tpu.memory_space<vmem>>, vector<8x128xf32>
    tpu.vector_store %arg4[%c0_5, %c0_6], %11 {strides = array<i32>} : memref<8x128xf32, #tpu.memory_space<vmem>>, vector<8x128xf32>,
    return
  }
  func.func @transform_0(%arg0: i32, %arg1: i32) -> (i32, i32) {
    %c0_i32 = arith.constant 0 : i32
    %c0_i32_0 = arith.constant 0 : i32
    return %arg0, %c0_i32 : i32, i32
  }
  func.func @transform_1(%arg0: i32, %arg1: i32) -> (i32, i32) {
    %c0_i32 = arith.constant 0 : i32
    %c0_i32_0 = arith.constant 0 : i32
    return %c0_i32, %arg1 : i32, i32
  }
  func.func @transform_2(%arg0: i32, %arg1: i32) -> (i32, i32) {
    %c0_i32 = arith.constant 0 : i32
    return %arg0, %arg1 : i32, i32
  }
}

</mosaic_0001>

<llo_original>
// kernel: tpu_custom_call.1
$region0: #{tpu_custom_call.1}
  #allocation0 [shape = 'u32[]', space=smem, size = 0x4, offset = 0x4, fixed_abs, tag = 'smem constant byte address 0x4 - core index']
  #allocation1 [shape = 'u32[144,128]{1,0:T(1,128)}', space=vmem, size = 0x12000, scoped, tag = 'internal scratch']
  %s0 = inlined_call_operand.hbm [shape: f32[8,32], index: 0, kind: input, shape index: {}]
  %s1 = inlined_call_operand.hbm [shape: bf16[32,128], index: 1, kind: input, shape index: {}]
  %s2 = inlined_call_operand.hbm [shape: f32[8,128], index: 2, kind: output, shape index: {}]
  %s3 = sld [smem:[#allocation0]]
  $region26: #{tpu_custom_call.1} parent=0
    _
  %s5 = ssub.s32 1, %s3
  %s6 = scalar_select 0, %s5, %s3
  $region1: #{tpu_custom_call.1} parent=0
    #allocation2 [shape = 'u8[4096]{0}', space=vmem, size = 0x1000, scoped, tag = 'input window, operand 0, single buffered']
    #allocation3 [shape = 's32[1]{0}', space=sflag, size = 0x4, scoped, tag = 'scoped memory for tpu_custom_call.1']
    #allocation4 [shape = 's32[1]{0}', space=sflag, size = 0x4, scoped, tag = 'scoped memory for tpu_custom_call.1']
    #allocation5 [shape = 'u8[8192]{0}', space=vmem, size = 0x2000, scoped, tag = 'input window, operand 1, single buffered']
    #allocation6 [shape = 's32[1]{0}', space=sflag, size = 0x4, scoped, tag = 'scoped memory for tpu_custom_call.1']
    #allocation7 [shape = 'u8[4096]{0}', space=vmem, size = 0x1000, scoped, tag = 'output window, operand 0, single buffered']
    %7 = vsyncpa [#allocation3], 0
    %8 = vsyncpa [#allocation6], 0
    %9 = vsyncpa [#allocation4], 0
    // Predicated region
    $region2: #{tpu_custom_call.1} parent=1 // pred_check
      _
    $region3: #{tpu_custom_call.1} parent=1 // pred_check_branch
      %11 = sbr.rel (0) target = $region5
    $region4: #{tpu_custom_call.1} parent=1 // pred_region
      %s13 = ssub.s32 128, 128
      %14 = vsyncadd [#allocation3], %s13
      %s16 = sshll.u32 [#allocation2], 4
      %s17 = int_to_ptr.vmem [resolvable:$true] %s16
      %19 = dma.hbm_to_vmem [thread:$0]  %s0, 128, %s17, [#allocation3]
    $region5: #{tpu_custom_call.1} parent=1 // pred_fallthru
      _
    // Predicated region
    $region6: #{tpu_custom_call.1} parent=1 // pred_check
      _
    $region7: #{tpu_custom_call.1} parent=1 // pred_check_branch
      %21 = sbr.rel (0) target = $region9
    $region8: #{tpu_custom_call.1} parent=1 // pred_region
      %s23 = ssub.s32 256, 256
      %24 = vsyncadd [#allocation6], %s23
      %s25 = sshll.u32 [#allocation5], 4
      %s26 = int_to_ptr.vmem [resolvable:$true] %s25
      %31 = dma.hbm_to_vmem [thread:$0]  %s1, 256, %s26, [#allocation6], 64, 64, 4
    $region9: #{tpu_custom_call.1} parent=1 // pred_fallthru
      _
    // Predicated region
    $region10: #{tpu_custom_call.1} parent=1 // pred_check
      _
    $region11: #{tpu_custom_call.1} parent=1 // pred_check_branch
      %33 = sbr.rel (0) target = $region13
    $region12: #{tpu_custom_call.1} parent=1 // pred_region
      %34 = dma.done [#allocation3], 128
    $region13: #{tpu_custom_call.1} parent=1 // pred_fallthru
      _
    // Predicated region
    $region14: #{tpu_custom_call.1} parent=1 // pred_check
      _
    $region15: #{tpu_custom_call.1} parent=1 // pred_check_branch
      %36 = sbr.rel (0) target = $region17
    $region16: #{tpu_custom_call.1} parent=1 // pred_region
      %37 = dma.done [#allocation6], 256
    $region17: #{tpu_custom_call.1} parent=1 // pred_fallthru
      _
    %v39 = vld [vmem:[#allocation2] sm:$0xff]
    %v40 = vmul.f32 %v39, %v39
    %vm41 = vcmask 261120
    %v42 = vsel %vm41, %v40, 0.0
    %43 = vadd.xlane.f32.xlu0 %v42
    %v44 = vpop.xlane.xlu0 %43
    %v45 = vmax.f32 %v44, 1e-24
    %v46 = vrsqrt.pop %v45
    %v47 = vmul.f32 %v39, %v46
    %v48 = vpack.c.bf16 %v47, %v47
    %v49 = vld [vmem:[#allocation5] sm:$0xf]
    %v50 = vld [vmem:[#allocation5 + $0x4] sm:$0xf]
    %v51 = vld [vmem:[#allocation5 + $0x8] sm:$0xf]
    %v52 = vld [vmem:[#allocation5 + $0xc] sm:$0xf]
    %v57 = vunpack.c.l.b16 %v49
    %v58 = vunpack.c.l.b16 %v50
    %v59 = vunpack.c.l.b16 %v51
    %v60 = vunpack.c.l.b16 %v52
    %v61 = vpack.c.b16 %v58, %v57
    %v62 = vpack.c.b16 %v60, %v59
    %v66 = vsel %vm41, %v48, 0
    %68 = vmatprep.subr.bf16.mxu0 0
    %69 = vmatpush1.bf16.msra.mxu0 %v61
    %70 = vmatprep.subr.bf16.mxu0 0
    %71 = vmatpush1.bf16.msra.mxu0 %v62
    %72 = vmatprep.subr.bf16.mxu0 0
    %73 = vmatpush1.bf16.msra.mxu0 0
    %74 = vmatprep.subr.bf16.mxu0 0
    %75 = vmatpush1.bf16.msra.mxu0 0
    %76 = vmatprep.subr.bf16.mxu0 0
    %77 = vmatpush1.bf16.msra.mxu0 0
    %78 = vmatprep.subr.bf16.mxu0 0
    %79 = vmatpush1.bf16.msra.mxu0 0
    %80 = vmatprep.subr.bf16.mxu0 0
    %81 = vmatpush1.bf16.msra.mxu0 0
    %82 = vmatprep.subr.bf16.mxu0 0
    %83 = vmatpush1.bf16.msra.mxu0 0
    %84 = vmatprep.subr.bf16.mxu0 0
    %85 = vmatpush1.bf16.msra.mxu0 0
    %86 = vmatprep.subr.bf16.mxu0 0
    %87 = vmatpush1.bf16.msra.mxu0 0
    %88 = vmatprep.subr.bf16.mxu0 0
    %89 = vmatpush1.bf16.msra.mxu0 0
    %90 = vmatprep.subr.bf16.mxu0 0
    %91 = vmatpush1.bf16.msra.mxu0 0
    %92 = vmatprep.subr.bf16.mxu0 0
    %93 = vmatpush1.bf16.msra.mxu0 0
    %94 = vmatprep.subr.bf16.mxu0 0
    %95 = vmatpush1.bf16.msra.mxu0 0
    %96 = vmatprep.subr.bf16.mxu0 0
    %97 = vmatpush1.bf16.msra.mxu0 0
    %98 = vmatprep.subr.bf16.mxu0 0
    %99 = vmatpush1.bf16.msra.mxu0 0
    %100 = vmatprep.mubr.bf16.mxu0 0
    %101 = vmatmul.mubr.bf16.gmra.mrb[0].mxu0 %v66
    %v102 = vpop.f32.mrb[0].mxu0
    %v103 = vadd.f32 0.0, %v102
    %v104 = vpop.f32.mrb[0].mxu0
    %v105 = vpop.f32.mrb[0].mxu0
    %v106 = vpop.f32.mrb[0].mxu0
    %107 = vdwg.mxu0
    %108 = vst [vmem:[#allocation7] sm:$0xff] %v103
    // Predicated region
    $region18: #{tpu_custom_call.1} parent=1 // pred_check
      _
    $region19: #{tpu_custom_call.1} parent=1 // pred_check_branch
      %110 = sbr.rel (0) target = $region21
    $region20: #{tpu_custom_call.1} parent=1 // pred_region
      %s112 = ssub.s32 128, 128
      %113 = vsyncadd [#allocation4], %s112
      %s115 = sshll.u32 [#allocation7], 4
      %s116 = int_to_ptr.vmem [resolvable:$true] %s115
      %118 = dma.vmem_to_hbm [thread:$0]  %s116, 128, %s2, [#allocation4]
    $region21: #{tpu_custom_call.1} parent=1 // pred_fallthru
      _
    // Predicated region
    $region22: #{tpu_custom_call.1} parent=1 // pred_check
      _
    $region23: #{tpu_custom_call.1} parent=1 // pred_check_branch
      %120 = sbr.rel (0) target = $region25
    $region24: #{tpu_custom_call.1} parent=1 // pred_region
      %121 = dma.done [#allocation4], 128
    $region25: #{tpu_custom_call.1} parent=1 // pred_fallthru
      _
    %122 = vsyncpa [#allocation3], 1
    %123 = vsyncpa [#allocation6], 1
    %124 = vsyncpa [#allocation4], 1

</llo_original>
